<compile_context>
chip_gen: v7x
topology: tpu7x:2x2x1
jax: 0.10.0
libtpu: 0.0.40
codegen_flags: <defaults>
</compile_context>

<pallas_src>
import numpy as np
import jax
import jax.numpy as jnp
from jax import lax
from jax.experimental import pallas as pl
from jax.experimental.pallas import tpu as pltpu

_EPS = 1e-5  # PyTorch BatchNorm2d default eps


# ---------------------------------------------------------------------------
# Kernel
# ---------------------------------------------------------------------------
def _make_block_kernel(stride, Ho, conv_shortcut):
    """One grid step = one image, activations as lane-dense (rows, W*C) slabs."""

    def _shift_rows(v, off):
        """u[i, :] = v[i + off, :], zero-filled outside [0, rows)."""
        if off == 0:
            return v
        rows = v.shape[0]
        rolled = pltpu.roll(v, shift=(-off) % rows, axis=0)   # XLU sublane roll
        idx = lax.broadcasted_iota(jnp.int32, v.shape, 0)
        bad = (idx == rows - 1) if off > 0 else (idx == 0)
        return jnp.where(bad, 0.0, rolled)

    def body(x_ref, w1_ref, b1_ref, w2_ref, b2_ref, *rest):
        if conv_shortcut:
            ws_ref, bs_ref, o_ref = rest
        else:
            (o_ref,) = rest

        out2d_shape = o_ref.shape[1:]                    # (Ho, Wo*Cout)

        # ----- conv1 (+folded BN1) and optional shortcut conv, stride s -----
        # One lane-dense matmul per kernel row: (Ho, W*Cin) @ (W*Cin, Wo*Cout)
        # The row patches are plain slices of the parity-split, row-padded
        # input block and are shared between conv1 and the shortcut conv.
        acc1 = jnp.zeros(out2d_shape, jnp.float32)
        accs = jnp.zeros(out2d_shape, jnp.float32) if conv_shortcut else None
        for dh in range(3):
            p = (dh - 1) % stride             # row-parity plane
            r0 = (dh - 1) // stride + 1       # start row inside padded plane
            rows = x_ref[0, p, r0:r0 + Ho, :].astype(jnp.bfloat16)
            acc1 = acc1 + jnp.dot(rows, w1_ref[dh],
                                  preferred_element_type=jnp.float32)
            if conv_shortcut:
                accs = accs + jnp.dot(rows, ws_ref[dh],
                                      preferred_element_type=jnp.float32)

        y1 = jnp.maximum(acc1 + b1_ref[...], 0.0)        # ReLU(BN1(conv1(x)))

        if conv_shortcut:
            shortcut = accs + bs_ref[...]                # BNs(convs(x)+bias)
        else:
            shortcut = x_ref[0, 0, 1:1 + Ho, :]          # identity, f32

        # ----- conv2 (+folded BN2), stride 1 --------------------------------
        # Row halo via roll+mask on the in-flight y1 (no pad scratch, no VMEM
        # round trip); column halo is inside the banded weights.
        acc2 = jnp.zeros(out2d_shape, jnp.float32)
        for dh in range(3):
            rows2 = _shift_rows(y1, dh - 1).astype(jnp.bfloat16)
            acc2 = acc2 + jnp.dot(rows2, w2_ref[dh],
                                  preferred_element_type=jnp.float32)

        out = jnp.maximum(acc2 + b2_ref[...] + shortcut, 0.0)
        o_ref[0] = out.astype(o_ref.dtype)               # lane-dense store

    return body


# ---------------------------------------------------------------------------
# Wrapper helpers
# ---------------------------------------------------------------------------
def _fold_bn_banded(w_oihw, bn, w_in, stride, conv_bias=None, eps=_EPS):
    """Fold inference BN into the conv, then build block-banded weights.

    Returns
      band:  (3, w_in*Cin, w_out*Cout) bf16 -- per-kernel-row banded matrices
             (W taps + W zero padding + stride + channel contraction).
      bias:  (1, w_out*Cout) f32 row (BN bias, tiled over output columns).
    """
    gamma, beta, mean, var = bn
    scale = gamma / jnp.sqrt(var + eps)                        # (Cout,)
    bias = beta - mean * scale
    if conv_bias is not None:
        bias = bias + conv_bias * scale
    cout, cin = w_oihw.shape[0], w_oihw.shape[1]
    wf = jnp.transpose(w_oihw * scale[:, None, None, None],
                       (2, 3, 1, 0))                           # (kh,kw,ci,co)

    w_out = (w_in - 1) // stride + 1
    # Placement: input column wi feeds output column wo through tap dw iff
    # wi == stride*wo + dw - 1 (out-of-range wi -> conv zero padding).
    P = np.zeros((3, w_in, w_out), np.float32)
    for dw in range(3):
        for wo in range(w_out):
            wi = stride * wo + dw - 1
            if 0 <= wi < w_in:
                P[dw, wi, wo] = 1.0
    band = jnp.einsum('xiv,hxcf->hicvf', jnp.asarray(P), wf)
    band = band.reshape(3, w_in * cin, w_out * cout).astype(jnp.bfloat16)
    bias_row = jnp.tile(bias, w_out).reshape(1, w_out * cout).astype(jnp.float32)
    return band, bias_row


def basicblock_forward(x, params, *, stride=1):
    """x: (B, Cin, H, W) float32 -> (B, Cout, Ho, Wo) float32."""
    assert stride in (1, 2), "only stride 1 and 2 are supported"
    B, Cin, H, W = x.shape
    Cout = params["w1"].shape[0]
    conv_shortcut = "ws" in params
    if not conv_shortcut:
        assert stride == 1 and Cin == Cout, (
            "identity shortcut requires stride == 1 and in_planes == planes")

    Ho = (H - 1) // stride + 1
    Wo = (W - 1) // stride + 1
    WCin, WoC = W * Cin, Wo * Cout

    # Folded-BN banded weights (bf16) + bias rows (f32).
    w1b, b1r = _fold_bn_banded(params["w1"], params["bn1"], W, stride)
    w2b, b2r = _fold_bn_banded(params["w2"], params["bn2"], Wo, 1)
    operands = [w1b, b1r, w2b, b2r]
    if conv_shortcut:
        wsb, bsr = _fold_bn_banded(params["ws"], params["bns"], W, stride,
                                   conv_bias=params["bs"])
        operands += [wsb, bsr]

    # Lane-dense input slab (B, H, W*Cin), rows split by parity for strided
    # row taps, with a 1-row zero margin top/bottom so every in-kernel row tap
    # is a plain slice (replaces the old padded NHWC scratch + full re-zero).
    x2d = jnp.transpose(x.astype(jnp.float32), (0, 2, 3, 1)).reshape(B, H, WCin)
    planes = []
    for p in range(stride):
        xp = x2d[:, p::stride]                               # (B, n_p, W*Cin)
        planes.append(jnp.pad(xp, ((0, 0), (1, Ho + 1 - xp.shape[1]), (0, 0))))
    xplanes = jnp.stack(planes, axis=1)                      # (B, s, Ho+2, W*Cin)

    kernel = _make_block_kernel(stride, Ho, conv_shortcut)

    in_specs = [
        pl.BlockSpec((1, stride, Ho + 2, WCin), lambda b: (b, 0, 0, 0)),
        pl.BlockSpec((3, WCin, WoC), lambda b: (0, 0, 0)),
        pl.BlockSpec((1, WoC), lambda b: (0, 0)),
        pl.BlockSpec((3, WoC, WoC), lambda b: (0, 0, 0)),
        pl.BlockSpec((1, WoC), lambda b: (0, 0)),
    ]
    if conv_shortcut:
        in_specs += [
            pl.BlockSpec((3, WCin, WoC), lambda b: (0, 0, 0)),
            pl.BlockSpec((1, WoC), lambda b: (0, 0)),
        ]

    out2d = pl.pallas_call(
        kernel,
        out_shape=jax.ShapeDtypeStruct((B, Ho, WoC), jnp.float32),
        grid=(B,),
        in_specs=in_specs,
        out_specs=pl.BlockSpec((1, Ho, WoC), lambda b: (b, 0, 0)),
        compiler_params=pltpu.CompilerParams(
            dimension_semantics=("parallel",)),
    )(xplanes, *operands)

    # (B, Ho, Wo*Cout) -> (B, Cout, Ho, Wo)   (module interface is NCHW)
    return jnp.transpose(out2d.reshape(B, Ho, Wo, Cout), (0, 3, 1, 2))


# ---------------------------------------------------------------------------
# Pure-JAX reference (matches the PyTorch module, BN in inference mode)
# ---------------------------------------------------------------------------
def basicblock_reference(x, params, *, stride=1):
    def conv(inp, w, s, bias=None):
        y = lax.conv_general_dilated(
            inp, w, window_strides=(s, s), padding=((1, 1), (1, 1)),
            dimension_numbers=("NCHW", "OIHW", "NCHW"),
            precision=lax.Precision.HIGHEST)
        if bias is not None:
            y = y + bias[None, :, None, None]
        return y

    def bn(y, p):
        gamma, beta, mean, var = p
        s = gamma / jnp.sqrt(var + _EPS)
        return y * s[None, :, None, None] + (beta - mean * s)[None, :, None, None]

    out = jax.nn.relu(bn(conv(x, params["w1"], stride), params["bn1"]))
    out = bn(conv(out, params["w2"], 1), params["bn2"])
    if "ws" in params:
        sc = bn(conv(x, params["ws"], stride, params["bs"]), params["bns"])
    else:
        sc = x
    return jax.nn.relu(out + sc)


# ---------------------------------------------------------------------------
# Deterministic parameter construction + smoke test
# ---------------------------------------------------------------------------
def _make_params(key, in_planes, planes, conv_shortcut):
    ks = jax.random.split(key, 8)

    def bn_params(k):
        k1, k2, k3, k4 = jax.random.split(k, 4)
        gamma = 1.0 + 0.1 * jax.random.normal(k1, (planes,), dtype=jnp.float32)
        beta = 0.1 * jax.random.normal(k2, (planes,), dtype=jnp.float32)
        mean = 0.1 * jax.random.normal(k3, (planes,), dtype=jnp.float32)
        var = jax.random.uniform(k4, (planes,), minval=0.5, maxval=1.5,
                                 dtype=jnp.float32)
        return (gamma, beta, mean, var)

    p = {
        "w1": 0.2 * jax.random.normal(ks[0], (planes, in_planes, 3, 3),
                                      dtype=jnp.float32),
        "bn1": bn_params(ks[1]),
        "w2": 0.2 * jax.random.normal(ks[2], (planes, planes, 3, 3),
                                      dtype=jnp.float32),
        "bn2": bn_params(ks[3]),
    }
    if conv_shortcut:
        p["ws"] = 0.2 * jax.random.normal(ks[4], (planes, in_planes, 3, 3),
                                          dtype=jnp.float32)
        p["bs"] = 0.1 * jax.random.normal(ks[5], (planes,), dtype=jnp.float32)
        p["bns"] = bn_params(ks[6])
    return p


if __name__ == "__main__":
    key = jax.random.PRNGKey(0)
    kx, kpA, kpB, kpC = jax.random.split(key, 4)

    B, Cin, H, W = 2, 4, 16, 16
    x = jax.random.normal(kx, (B, Cin, H, W), dtype=jnp.float32)

    # bf16 MXU operands (f32 accumulation) => compare against the f32
    # HIGHEST-precision reference with a correspondingly looser tolerance.
    RTOL, ATOL = 5e-2, 1e-1

    # Config A: in_planes(4) != planes(8), stride=1 -> conv+BN shortcut path.
    planes = 8
    pA = _make_params(kpA, Cin, planes, conv_shortcut=True)
    outA = jax.block_until_ready(basicblock_forward(x, pA, stride=1))
    refA = jax.block_until_ready(basicblock_reference(x, pA, stride=1))
    assert outA.shape == (B, planes, H, W), outA.shape
    np.testing.assert_allclose(np.asarray(outA), np.asarray(refA),
                               rtol=RTOL, atol=ATOL)

    # Config B: in_planes == planes, stride=1 -> identity shortcut path.
    pB = _make_params(kpB, Cin, Cin, conv_shortcut=False)
    outB = jax.block_until_ready(basicblock_forward(x, pB, stride=1))
    refB = jax.block_until_ready(basicblock_reference(x, pB, stride=1))
    assert outB.shape == (B, Cin, H, W), outB.shape
    np.testing.assert_allclose(np.asarray(outB), np.asarray(refB),
                               rtol=RTOL, atol=ATOL)

    # Config C: stride=2 (strided conv1 + strided conv shortcut).
    pC = _make_params(kpC, Cin, planes, conv_shortcut=True)
    outC = jax.block_until_ready(basicblock_forward(x, pC, stride=2))
    refC = jax.block_until_ready(basicblock_reference(x, pC, stride=2))
    assert outC.shape == (B, planes, H // 2, W // 2), outC.shape
    np.testing.assert_allclose(np.asarray(outC), np.asarray(refC),
                               rtol=RTOL, atol=ATOL)

    print("KERNEL_OK")
</pallas_src>

<mosaic_0001>
module attributes {stable_mosaic.version = 11 : i64} {
  func.func @body(%arg0: i32, %arg1: memref<1x1x18x64xf32, #tpu.memory_space<vmem>>, %arg2: memref<3x64x128xbf16, #tpu.memory_space<vmem>>, %arg3: memref<1x128xf32, #tpu.memory_space<vmem>>, %arg4: memref<3x128x128xbf16, #tpu.memory_space<vmem>>, %arg5: memref<1x128xf32, #tpu.memory_space<vmem>>, %arg6: memref<3x64x128xbf16, #tpu.memory_space<vmem>>, %arg7: memref<1x128xf32, #tpu.memory_space<vmem>>, %arg8: memref<1x16x128xf32, #tpu.memory_space<vmem>>) attributes {dimension_semantics = [#tpu.dimension_semantics<parallel>], iteration_bounds = array<i64: 2>, scalar_prefetch = 0 : i64, scratch_operands = 0 : i64, tpu.core_type = #tpu.core_type<tc>, window_params = [{transform_indices = @transform_0, window_bounds = array<i64: 1, 1, 18, 64>}, {pipeline_mode = #tpu.pipeline_mode<synchronous>, transform_indices = @transform_1, window_bounds = array<i64: 3, 64, 128>}, {pipeline_mode = #tpu.pipeline_mode<synchronous>, transform_indices = @transform_2, window_bounds = array<i64: 1, 128>}, {pipeline_mode = #tpu.pipeline_mode<synchronous>, transform_indices = @transform_3, window_bounds = array<i64: 3, 128, 128>}, {pipeline_mode = #tpu.pipeline_mode<synchronous>, transform_indices = @transform_4, window_bounds = array<i64: 1, 128>}, {pipeline_mode = #tpu.pipeline_mode<synchronous>, transform_indices = @transform_5, window_bounds = array<i64: 3, 64, 128>}, {pipeline_mode = #tpu.pipeline_mode<synchronous>, transform_indices = @transform_6, window_bounds = array<i64: 1, 128>}, {transform_indices = @transform_7, window_bounds = array<i64: 1, 16, 128>}]} {
    %cst = arith.constant 0.000000e+00 : f32
    %0 = vector.broadcast %cst : f32 to vector<16x128xf32>
    %cst_0 = arith.constant 0.000000e+00 : f32
    %1 = vector.broadcast %cst_0 : f32 to vector<16x128xf32>
    %c0 = arith.constant 0 : index
    %c0_1 = arith.constant 0 : index
    %c0_2 = arith.constant 0 : index
    %c0_3 = arith.constant 0 : index
    %2 = vector.load %arg1[%c0, %c0_1, %c0_2, %c0_3] : memref<1x1x18x64xf32, #tpu.memory_space<vmem>>, vector<1x1x16x64xf32>
    %3 = vector.shape_cast %2 : vector<1x1x16x64xf32> to vector<16x64xf32>
    %4 = arith.truncf %3 : vector<16x64xf32> to vector<16x64xbf16>
    %c0_4 = arith.constant 0 : index
    %c0_5 = arith.constant 0 : index
    %c0_6 = arith.constant 0 : index
    %5 = vector.load %arg2[%c0_4, %c0_5, %c0_6] : memref<3x64x128xbf16, #tpu.memory_space<vmem>>, vector<1x64x128xbf16>
    %6 = vector.shape_cast %5 : vector<1x64x128xbf16> to vector<64x128xbf16>
    %cst_7 = arith.constant dense<0.000000e+00> : vector<16x128xf32>
    %7 = tpu.matmul %4, %6, %cst_7 {dimension_numbers = #tpu.dot_dimension_numbers<[1], [0], [0], [1], [0, 0, 1, 1], [], []>} : vector<16x64xbf16>, vector<64x128xbf16>, vector<16x128xf32> -> vector<16x128xf32>
    %8 = arith.addf %0, %7 : vector<16x128xf32>
    %c0_8 = arith.constant 0 : index
    %c0_9 = arith.constant 0 : index
    %c0_10 = arith.constant 0 : index
    %9 = vector.load %arg6[%c0_8, %c0_9, %c0_10] : memref<3x64x128xbf16, #tpu.memory_space<vmem>>, vector<1x64x128xbf16>
    %10 = vector.shape_cast %9 : vector<1x64x128xbf16> to vector<64x128xbf16>
    %cst_11 = arith.constant dense<0.000000e+00> : vector<16x128xf32>
    %11 = tpu.matmul %4, %10, %cst_11 {dimension_numbers = #tpu.dot_dimension_numbers<[1], [0], [0], [1], [0, 0, 1, 1], [], []>} : vector<16x64xbf16>, vector<64x128xbf16>, vector<16x128xf32> -> vector<16x128xf32>
    %12 = arith.addf %1, %11 : vector<16x128xf32>
    %c0_12 = arith.constant 0 : index
    %c0_13 = arith.constant 0 : index
    %c1 = arith.constant 1 : index
    %c0_14 = arith.constant 0 : index
    %13 = vector.load %arg1[%c0_12, %c0_13, %c1, %c0_14] : memref<1x1x18x64xf32, #tpu.memory_space<vmem>>, vector<1x1x16x64xf32>
    %14 = vector.shape_cast %13 : vector<1x1x16x64xf32> to vector<16x64xf32>
    %15 = arith.truncf %14 : vector<16x64xf32> to vector<16x64xbf16>
    %c1_15 = arith.constant 1 : index
    %c0_16 = arith.constant 0 : index
    %c0_17 = arith.constant 0 : index
    %16 = vector.load %arg2[%c1_15, %c0_16, %c0_17] : memref<3x64x128xbf16, #tpu.memory_space<vmem>>, vector<1x64x128xbf16>
    %17 = vector.shape_cast %16 : vector<1x64x128xbf16> to vector<64x128xbf16>
    %cst_18 = arith.constant dense<0.000000e+00> : vector<16x128xf32>
    %18 = tpu.matmul %15, %17, %cst_18 {dimension_numbers = #tpu.dot_dimension_numbers<[1], [0], [0], [1], [0, 0, 1, 1], [], []>} : vector<16x64xbf16>, vector<64x128xbf16>, vector<16x128xf32> -> vector<16x128xf32>
    %19 = arith.addf %8, %18 : vector<16x128xf32>
    %c1_19 = arith.constant 1 : index
    %c0_20 = arith.constant 0 : index
    %c0_21 = arith.constant 0 : index
    %20 = vector.load %arg6[%c1_19, %c0_20, %c0_21] : memref<3x64x128xbf16, #tpu.memory_space<vmem>>, vector<1x64x128xbf16>
    %21 = vector.shape_cast %20 : vector<1x64x128xbf16> to vector<64x128xbf16>
    %cst_22 = arith.constant dense<0.000000e+00> : vector<16x128xf32>
    %22 = tpu.matmul %15, %21, %cst_22 {dimension_numbers = #tpu.dot_dimension_numbers<[1], [0], [0], [1], [0, 0, 1, 1], [], []>} : vector<16x64xbf16>, vector<64x128xbf16>, vector<16x128xf32> -> vector<16x128xf32>
    %23 = arith.addf %12, %22 : vector<16x128xf32>
    %c0_23 = arith.constant 0 : index
    %c0_24 = arith.constant 0 : index
    %c2 = arith.constant 2 : index
    %c0_25 = arith.constant 0 : index
    %24 = vector.load %arg1[%c0_23, %c0_24, %c2, %c0_25] : memref<1x1x18x64xf32, #tpu.memory_space<vmem>>, vector<1x1x16x64xf32>
    %25 = vector.shape_cast %24 : vector<1x1x16x64xf32> to vector<16x64xf32>
    %26 = arith.truncf %25 : vector<16x64xf32> to vector<16x64xbf16>
    %c2_26 = arith.constant 2 : index
    %c0_27 = arith.constant 0 : index
    %c0_28 = arith.constant 0 : index
    %27 = vector.load %arg2[%c2_26, %c0_27, %c0_28] : memref<3x64x128xbf16, #tpu.memory_space<vmem>>, vector<1x64x128xbf16>
    %28 = vector.shape_cast %27 : vector<1x64x128xbf16> to vector<64x128xbf16>
    %cst_29 = arith.constant dense<0.000000e+00> : vector<16x128xf32>
    %29 = tpu.matmul %26, %28, %cst_29 {dimension_numbers = #tpu.dot_dimension_numbers<[1], [0], [0], [1], [0, 0, 1, 1], [], []>} : vector<16x64xbf16>, vector<64x128xbf16>, vector<16x128xf32> -> vector<16x128xf32>
    %30 = arith.addf %19, %29 : vector<16x128xf32>
    %c2_30 = arith.constant 2 : index
    %c0_31 = arith.constant 0 : index
    %c0_32 = arith.constant 0 : index
    %31 = vector.load %arg6[%c2_30, %c0_31, %c0_32] : memref<3x64x128xbf16, #tpu.memory_space<vmem>>, vector<1x64x128xbf16>
    %32 = vector.shape_cast %31 : vector<1x64x128xbf16> to vector<64x128xbf16>
    %cst_33 = arith.constant dense<0.000000e+00> : vector<16x128xf32>
    %33 = tpu.matmul %26, %32, %cst_33 {dimension_numbers = #tpu.dot_dimension_numbers<[1], [0], [0], [1], [0, 0, 1, 1], [], []>} : vector<16x64xbf16>, vector<64x128xbf16>, vector<16x128xf32> -> vector<16x128xf32>
    %34 = arith.addf %23, %33 : vector<16x128xf32>
    %c0_34 = arith.constant 0 : index
    %c0_35 = arith.constant 0 : index
    %35 = vector.load %arg3[%c0_34, %c0_35] : memref<1x128xf32, #tpu.memory_space<vmem>>, vector<1x128xf32>
    %36 = vector.broadcast %35 : vector<1x128xf32> to vector<16x128xf32>
    %37 = arith.addf %30, %36 : vector<16x128xf32>
    %cst_36 = arith.constant 0.000000e+00 : f32
    %38 = vector.broadcast %cst_36 : f32 to vector<16x128xf32>
    %39 = arith.maximumf %37, %38 : vector<16x128xf32>
    %c0_37 = arith.constant 0 : index
    %c0_38 = arith.constant 0 : index
    %40 = vector.load %arg7[%c0_37, %c0_38] : memref<1x128xf32, #tpu.memory_space<vmem>>, vector<1x128xf32>
    %41 = vector.broadcast %40 : vector<1x128xf32> to vector<16x128xf32>
    %42 = arith.addf %34, %41 : vector<16x128xf32>
    %cst_39 = arith.constant 0.000000e+00 : f32
    %43 = vector.broadcast %cst_39 : f32 to vector<16x128xf32>
    %c1_i32 = arith.constant 1 : i32
    %44 = tpu.dynamic_rotate %39 by %c1_i32 dim 0 : vector<16x128xf32>, i32 -> vector<16x128xf32>
    %45 = tpu.iota {dimensions = array<i32: 0>} : vector<16x128xi32>
    %c0_i32 = arith.constant 0 : i32
    %46 = vector.broadcast %c0_i32 : i32 to vector<16x128xi32>
    %47 = arith.cmpi eq, %45, %46 : vector<16x128xi32>
    %cst_40 = arith.constant 0.000000e+00 : f32
    %48 = vector.broadcast %cst_40 : f32 to vector<16x128xf32>
    %49 = arith.select %47, %48, %44 : vector<16x128xi1>, vector<16x128xf32>
    %50 = arith.truncf %49 : vector<16x128xf32> to vector<16x128xbf16>
    %c0_41 = arith.constant 0 : index
    %c0_42 = arith.constant 0 : index
    %c0_43 = arith.constant 0 : index
    %51 = vector.load %arg4[%c0_41, %c0_42, %c0_43] : memref<3x128x128xbf16, #tpu.memory_space<vmem>>, vector<1x128x128xbf16>
    %52 = vector.shape_cast %51 : vector<1x128x128xbf16> to vector<128x128xbf16>
    %cst_44 = arith.constant dense<0.000000e+00> : vector<16x128xf32>
    %53 = tpu.matmul %50, %52, %cst_44 {dimension_numbers = #tpu.dot_dimension_numbers<[1], [0], [0], [1], [0, 0, 1, 1], [], []>} : vector<16x128xbf16>, vector<128x128xbf16>, vector<16x128xf32> -> vector<16x128xf32>
    %54 = arith.addf %43, %53 : vector<16x128xf32>
    %55 = arith.truncf %39 : vector<16x128xf32> to vector<16x128xbf16>
    %c1_45 = arith.constant 1 : index
    %c0_46 = arith.constant 0 : index
    %c0_47 = arith.constant 0 : index
    %56 = vector.load %arg4[%c1_45, %c0_46, %c0_47] : memref<3x128x128xbf16, #tpu.memory_space<vmem>>, vector<1x128x128xbf16>
    %57 = vector.shape_cast %56 : vector<1x128x128xbf16> to vector<128x128xbf16>
    %cst_48 = arith.constant dense<0.000000e+00> : vector<16x128xf32>
    %58 = tpu.matmul %55, %57, %cst_48 {dimension_numbers = #tpu.dot_dimension_numbers<[1], [0], [0], [1], [0, 0, 1, 1], [], []>} : vector<16x128xbf16>, vector<128x128xbf16>, vector<16x128xf32> -> vector<16x128xf32>
    %59 = arith.addf %54, %58 : vector<16x128xf32>
    %c15_i32 = arith.constant 15 : i32
    %60 = tpu.dynamic_rotate %39 by %c15_i32 dim 0 : vector<16x128xf32>, i32 -> vector<16x128xf32>
    %61 = tpu.iota {dimensions = array<i32: 0>} : vector<16x128xi32>
    %c15_i32_49 = arith.constant 15 : i32
    %62 = vector.broadcast %c15_i32_49 : i32 to vector<16x128xi32>
    %63 = arith.cmpi eq, %61, %62 : vector<16x128xi32>
    %cst_50 = arith.constant 0.000000e+00 : f32
    %64 = vector.broadcast %cst_50 : f32 to vector<16x128xf32>
    %65 = arith.select %63, %64, %60 : vector<16x128xi1>, vector<16x128xf32>
    %66 = arith.truncf %65 : vector<16x128xf32> to vector<16x128xbf16>
    %c2_51 = arith.constant 2 : index
    %c0_52 = arith.constant 0 : index
    %c0_53 = arith.constant 0 : index
    %67 = vector.load %arg4[%c2_51, %c0_52, %c0_53] : memref<3x128x128xbf16, #tpu.memory_space<vmem>>, vector<1x128x128xbf16>
    %68 = vector.shape_cast %67 : vector<1x128x128xbf16> to vector<128x128xbf16>
    %cst_54 = arith.constant dense<0.000000e+00> : vector<16x128xf32>
    %69 = tpu.matmul %66, %68, %cst_54 {dimension_numbers = #tpu.dot_dimension_numbers<[1], [0], [0], [1], [0, 0, 1, 1], [], []>} : vector<16x128xbf16>, vector<128x128xbf16>, vector<16x128xf32> -> vector<16x128xf32>
    %70 = arith.addf %59, %69 : vector<16x128xf32>
    %c0_55 = arith.constant 0 : index
    %c0_56 = arith.constant 0 : index
    %71 = vector.load %arg5[%c0_55, %c0_56] : memref<1x128xf32, #tpu.memory_space<vmem>>, vector<1x128xf32>
    %72 = vector.broadcast %71 : vector<1x128xf32> to vector<16x128xf32>
    %73 = arith.addf %70, %72 : vector<16x128xf32>
    %74 = arith.addf %73, %42 : vector<16x128xf32>
    %cst_57 = arith.constant 0.000000e+00 : f32
    %75 = vector.broadcast %cst_57 : f32 to vector<16x128xf32>
    %76 = arith.maximumf %74, %75 : vector<16x128xf32>
    %c0_58 = arith.constant 0 : index
    %c0_59 = arith.constant 0 : index
    %c0_60 = arith.constant 0 : index
    %77 = vector.load %arg8[%c0_58, %c0_59, %c0_60] : memref<1x16x128xf32, #tpu.memory_space<vmem>>, vector<1x16x128xf32>
    %78 = vector.shape_cast %77 : vector<1x16x128xf32> to vector<16x128xf32>
    %79 = vector.shape_cast %76 : vector<16x128xf32> to vector<1x16x128xf32>
    tpu.vector_store %arg8[%c0_58, %c0_59, %c0_60], %79 {strides = array<i32>} : memref<1x16x128xf32, #tpu.memory_space<vmem>>, vector<1x16x128xf32>,
    return
  }
  func.func @transform_0(%arg0: i32) -> (i32, i32, i32, i32) {
    %c0_i32 = arith.constant 0 : i32
    %c0_i32_0 = arith.constant 0 : i32
    %c0_i32_1 = arith.constant 0 : i32
    %c0_i32_2 = arith.constant 0 : i32
    return %arg0, %c0_i32, %c0_i32_0, %c0_i32_1 : i32, i32, i32, i32
  }
  func.func @transform_1(%arg0: i32) -> (i32, i32, i32) {
    %c0_i32 = arith.constant 0 : i32
    %c0_i32_0 = arith.constant 0 : i32
    %c0_i32_1 = arith.constant 0 : i32
    %c0_i32_2 = arith.constant 0 : i32
    return %c0_i32, %c0_i32_0, %c0_i32_1 : i32, i32, i32
  }
  func.func @transform_2(%arg0: i32) -> (i32, i32) {
    %c0_i32 = arith.constant 0 : i32
    %c0_i32_0 = arith.constant 0 : i32
    %c0_i32_1 = arith.constant 0 : i32
    return %c0_i32, %c0_i32_0 : i32, i32
  }
  func.func @transform_3(%arg0: i32) -> (i32, i32, i32) {
    %c0_i32 = arith.constant 0 : i32
    %c0_i32_0 = arith.constant 0 : i32
    %c0_i32_1 = arith.constant 0 : i32
    %c0_i32_2 = arith.constant 0 : i32
    return %c0_i32, %c0_i32_0, %c0_i32_1 : i32, i32, i32
  }
  func.func @transform_4(%arg0: i32) -> (i32, i32) {
    %c0_i32 = arith.constant 0 : i32
    %c0_i32_0 = arith.constant 0 : i32
    %c0_i32_1 = arith.constant 0 : i32
    return %c0_i32, %c0_i32_0 : i32, i32
  }
  func.func @transform_5(%arg0: i32) -> (i32, i32, i32) {
    %c0_i32 = arith.constant 0 : i32
    %c0_i32_0 = arith.constant 0 : i32
    %c0_i32_1 = arith.constant 0 : i32
    %c0_i32_2 = arith.constant 0 : i32
    return %c0_i32, %c0_i32_0, %c0_i32_1 : i32, i32, i32
  }
  func.func @transform_6(%arg0: i32) -> (i32, i32) {
    %c0_i32 = arith.constant 0 : i32
    %c0_i32_0 = arith.constant 0 : i32
    %c0_i32_1 = arith.constant 0 : i32
    return %c0_i32, %c0_i32_0 : i32, i32
  }
  func.func @transform_7(%arg0: i32) -> (i32, i32, i32) {
    %c0_i32 = arith.constant 0 : i32
    %c0_i32_0 = arith.constant 0 : i32
    %c0_i32_1 = arith.constant 0 : i32
    return %arg0, %c0_i32, %c0_i32_0 : i32, i32, i32
  }
}

</mosaic_0001>

<llo_original>
// kernel: tpu_custom_call.1
$region0: #{tpu_custom_call.1}
  #allocation0 [shape = 'u32[]', space=smem, size = 0x4, offset = 0x4, fixed_abs, tag = 'smem constant byte address 0x4 - core index']
  #allocation1 [shape = 'u32[144,128]{1,0:T(1,128)}', space=vmem, size = 0x12000, scoped, tag = 'internal scratch']
  %s0 = inlined_call_operand.vmem [shape: f32[2,1,18,64], index: 0, kind: input, shape index: {}]
  %s1 = inlined_call_operand.hbm [shape: bf16[3,64,128], index: 1, kind: input, shape index: {}]
  %s2 = inlined_call_operand.vmem [shape: f32[1,128], index: 2, kind: input, shape index: {}]
  %s3 = inlined_call_operand.hbm [shape: bf16[3,128,128], index: 3, kind: input, shape index: {}]
  %s4 = inlined_call_operand.vmem [shape: f32[1,128], index: 4, kind: input, shape index: {}]
  %s5 = inlined_call_operand.vmem [shape: bf16[3,64,128], index: 5, kind: input, shape index: {}]
  %s6 = inlined_call_operand.vmem [shape: f32[1,128], index: 6, kind: input, shape index: {}]
  %s7 = inlined_call_operand.hbm [shape: f32[2,16,128], index: 7, kind: output, shape index: {}]
  %s8 = sld [smem:[#allocation0]]
  $region69: #{tpu_custom_call.1} parent=0
    _
  %s10 = ssub.s32 1, %s8
  %s11 = scalar_select 0, %s10, %s8
  $region1: #{tpu_custom_call.1} parent=0
    #allocation2 [shape = 'u8[49152]{0}', space=vmem, size = 0xc000, scoped, tag = 'input window, operand 1, single buffered']
    #allocation3 [shape = 's32[2]{0}', space=sflag, size = 0x8, scoped, tag = 'scoped memory for tpu_custom_call.1']
    #allocation4 [shape = 's32[2]{0}', space=sflag, size = 0x8, scoped, tag = 'scoped memory for tpu_custom_call.1']
    #allocation5 [shape = 'u8[98304]{0}', space=vmem, size = 0x18000, scoped, tag = 'input window, operand 3, single buffered']
    #allocation6 [shape = 's32[1]{0}', space=sflag, size = 0x4, scoped, tag = 'scoped memory for tpu_custom_call.1']
    #allocation7 [shape = 'u8[16384]{0}', space=vmem, size = 0x4000, scoped, tag = 'output window, operand 0']
    %12 = vsyncpa [#allocation3], 0
    %13 = vsyncpa [#allocation6], 0
    %14 = vsyncpa [#allocation4], 0
    %s15 = scalar_lea.sflag [#allocation4], 1
    %16 = vsyncpa %s15, 0
    loop: start=0, step=1, limit=4
    $region2: #{tpu_custom_call.1} parent=1 // loop_pre_header
      _
    $region3: #{tpu_custom_call.1} parent=1 // loop_header
      %s18 = sphi 0, %s22
      %p19 = scmp.ge.s32.totalorder %s18, 4
      %s28 = sphi 0, %s30
      %s31 = sphi 0, %s28
      %s32 = sphi 0, %s31
      %s48 = sphi 0, %s32
      %s52 = sphi 0, %s52
      %s54 = sphi 0, %s52
      %s55 = sphi 0, %s54
      %s69 = sphi 0, %s55
      %s73 = sphi 0, %s73
      %s75 = sphi 0, %s73
      %s76 = sphi 0, %s75
      %s90 = sphi 0, %s76
      %s94 = sphi 0, %s94
      %s96 = sphi 0, %s94
      %s97 = sphi 0, %s96
      %s111 = sphi 0, %s97
      %s115 = sphi 0, %s115
      %s117 = sphi 0, %s115
      %s118 = sphi 0, %s117
      %s132 = sphi 0, %s118
      %s136 = sphi 0, %s136
      %s138 = sphi 0, %s136
      %s139 = sphi 0, %s138
      %s153 = sphi 0, %s139
      %s157 = sphi 0, %s157
      %s159 = sphi 0, %s157
      %s160 = sphi 0, %s159
      %s174 = sphi 0, %s160
      %s180 = sphi 0, %s182
      %s183 = sphi 0, %s180
      %s184 = sphi 0, %s183
      %s200 = sphi 0, %s184
    $region4: #{tpu_custom_call.1} parent=1 // loop_header_branch
      %21 = sbr.rel (%p19) target = $region8
    $region5: #{tpu_custom_call.1} parent=1 // loop_body
      %s23 = ssub.s32 %s18, 1
      %s24 = ssub.s32 %s18, 2
      %s25 = sadd.s32 %s18, 1
      %s26 = ssub.s32 %s18, %s25
      %p27 = scmp.eq.s32.totalorder %s26, 0
      %s29 = sadd.s32 %s28, 1
      %s30 = scalar_select %p27, %s28, %s29
      %p33 = pneg %p27
      %p34 = scmp.eq.s32.totalorder %s18, 1
      %p35 = por %p33, %p34
      %p36 = scmp.ne.s32.totalorder %s28, %s31
      %p37 = scmp.eq.s32.totalorder %s18, 0
      %p38 = por %p36, %p37
      %p39 = scmp.ne.s32.totalorder %s28, %s31
      %p40 = scmp.eq.s32.totalorder %s23, 1
      %p41 = por %p39, %p40
      %p42 = scmp.ne.s32.totalorder %s31, %s32
      %p43 = scmp.eq.s32.totalorder %s23, 0
      %p44 = por %p42, %p43
      %p45 = scmp.ne.s32.totalorder %s31, %s32
      %p46 = scmp.eq.s32.totalorder %s24, 1
      %p47 = por %p45, %p46
      %p49 = scmp.ne.s32.totalorder %s32, %s48
      %p50 = scmp.eq.s32.totalorder %s24, 0
      %p51 = por %p49, %p50
      %s53 = sadd.s32 %s52, 1
      %p56 = scmp.eq.s32.totalorder %s18, 1
      %p57 = scmp.ne.s32.totalorder %s52, %s54
      %p58 = scmp.eq.s32.totalorder %s18, 0
      %p59 = por %p57, %p58
      %p60 = scmp.ne.s32.totalorder %s52, %s54
      %p61 = scmp.eq.s32.totalorder %s23, 1
      %p62 = por %p60, %p61
      %p63 = scmp.ne.s32.totalorder %s54, %s55
      %p64 = scmp.eq.s32.totalorder %s23, 0
      %p65 = por %p63, %p64
      %p66 = scmp.ne.s32.totalorder %s54, %s55
      %p67 = scmp.eq.s32.totalorder %s24, 1
      %p68 = por %p66, %p67
      %p70 = scmp.ne.s32.totalorder %s55, %s69
      %p71 = scmp.eq.s32.totalorder %s24, 0
      %p72 = por %p70, %p71
      %s74 = sadd.s32 %s73, 1
      %p77 = scmp.eq.s32.totalorder %s18, 1
      %p78 = scmp.ne.s32.totalorder %s73, %s75
      %p79 = scmp.eq.s32.totalorder %s18, 0
      %p80 = por %p78, %p79
      %p81 = scmp.ne.s32.totalorder %s73, %s75
      %p82 = scmp.eq.s32.totalorder %s23, 1
      %p83 = por %p81, %p82
      %p84 = scmp.ne.s32.totalorder %s75, %s76
      %p85 = scmp.eq.s32.totalorder %s23, 0
      %p86 = por %p84, %p85
      %p87 = scmp.ne.s32.totalorder %s75, %s76
      %p88 = scmp.eq.s32.totalorder %s24, 1
      %p89 = por %p87, %p88
      %p91 = scmp.ne.s32.totalorder %s76, %s90
      %p92 = scmp.eq.s32.totalorder %s24, 0
      %p93 = por %p91, %p92
      %s95 = sadd.s32 %s94, 1
      %p98 = scmp.eq.s32.totalorder %s18, 1
      %p99 = scmp.ne.s32.totalorder %s94, %s96
      %p100 = scmp.eq.s32.totalorder %s18, 0
      %p101 = por %p99, %p100
      %p102 = scmp.ne.s32.totalorder %s94, %s96
      %p103 = scmp.eq.s32.totalorder %s23, 1
      %p104 = por %p102, %p103
      %p105 = scmp.ne.s32.totalorder %s96, %s97
      %p106 = scmp.eq.s32.totalorder %s23, 0
      %p107 = por %p105, %p106
      %p108 = scmp.ne.s32.totalorder %s96, %s97
      %p109 = scmp.eq.s32.totalorder %s24, 1
      %p110 = por %p108, %p109
      %p112 = scmp.ne.s32.totalorder %s97, %s111
      %p113 = scmp.eq.s32.totalorder %s24, 0
      %p114 = por %p112, %p113
      %s116 = sadd.s32 %s115, 1
      %p119 = scmp.eq.s32.totalorder %s18, 1
      %p120 = scmp.ne.s32.totalorder %s115, %s117
      %p121 = scmp.eq.s32.totalorder %s18, 0
      %p122 = por %p120, %p121
      %p123 = scmp.ne.s32.totalorder %s115, %s117
      %p124 = scmp.eq.s32.totalorder %s23, 1
      %p125 = por %p123, %p124
      %p126 = scmp.ne.s32.totalorder %s117, %s118
      %p127 = scmp.eq.s32.totalorder %s23, 0
      %p128 = por %p126, %p127
      %p129 = scmp.ne.s32.totalorder %s117, %s118
      %p130 = scmp.eq.s32.totalorder %s24, 1
      %p131 = por %p129, %p130
      %p133 = scmp.ne.s32.totalorder %s118, %s132
      %p134 = scmp.eq.s32.totalorder %s24, 0
      %p135 = por %p133, %p134
      %s137 = sadd.s32 %s136, 1
      %p140 = scmp.eq.s32.totalorder %s18, 1
      %p141 = scmp.ne.s32.totalorder %s136, %s138
      %p142 = scmp.eq.s32.totalorder %s18, 0
      %p143 = por %p141, %p142
      %p144 = scmp.ne.s32.totalorder %s136, %s138
      %p145 = scmp.eq.s32.totalorder %s23, 1
      %p146 = por %p144, %p145
      %p147 = scmp.ne.s32.totalorder %s138, %s139
      %p148 = scmp.eq.s32.totalorder %s23, 0
      %p149 = por %p147, %p148
      %p150 = scmp.ne.s32.totalorder %s138, %s139
      %p151 = scmp.eq.s32.totalorder %s24, 1
      %p152 = por %p150, %p151
      %p154 = scmp.ne.s32.totalorder %s139, %s153
      %p155 = scmp.eq.s32.totalorder %s24, 0
      %p156 = por %p154, %p155
      %s158 = sadd.s32 %s157, 1
      %p161 = scmp.eq.s32.totalorder %s18, 1
      %p162 = scmp.ne.s32.totalorder %s157, %s159
      %p163 = scmp.eq.s32.totalorder %s18, 0
      %p164 = por %p162, %p163
      %p165 = scmp.ne.s32.totalorder %s157, %s159
      %p166 = scmp.eq.s32.totalorder %s23, 1
      %p167 = por %p165, %p166
      %p168 = scmp.ne.s32.totalorder %s159, %s160
      %p169 = scmp.eq.s32.totalorder %s23, 0
      %p170 = por %p168, %p169
      %p171 = scmp.ne.s32.totalorder %s159, %s160
      %p172 = scmp.eq.s32.totalorder %s24, 1
      %p173 = por %p171, %p172
      %p175 = scmp.ne.s32.totalorder %s160, %s174
      %p176 = scmp.eq.s32.totalorder %s24, 0
      %p177 = por %p175, %p176
      %s178 = ssub.s32 %s18, %s25
      %p179 = scmp.eq.s32.totalorder %s178, 0
      %s181 = sadd.s32 %s180, 1
      %s182 = scalar_select %p179, %s180, %s181
      %p185 = pneg %p179
      %p186 = scmp.eq.s32.totalorder %s18, 1
      %p187 = por %p185, %p186
      %p188 = scmp.ne.s32.totalorder %s180, %s183
      %p189 = scmp.eq.s32.totalorder %s18, 0
      %p190 = por %p188, %p189
      %p191 = scmp.ne.s32.totalorder %s180, %s183
      %p192 = scmp.eq.s32.totalorder %s23, 1
      %p193 = por %p191, %p192
      %p194 = scmp.ne.s32.totalorder %s183, %s184
      %p195 = scmp.eq.s32.totalorder %s23, 0
      %p196 = por %p194, %p195
      %p197 = scmp.ne.s32.totalorder %s183, %s184
      %p198 = scmp.eq.s32.totalorder %s24, 1
      %p199 = por %p197, %p198
      %p201 = scmp.ne.s32.totalorder %s184, %s200
      %p202 = scmp.eq.s32.totalorder %s24, 0
      %p203 = por %p201, %p202
      %p204 = scmp.le.s32.totalorder 1, %s18
      %p205 = scmp.lt.s32.totalorder %s18, 3
      %p206 = pnand %p204, %p205
      %p207 = pneg %p206
      // Predicated region
      $region9: #{tpu_custom_call.1} parent=5 // pred_check
        _
      $region10: #{tpu_custom_call.1} parent=5 // pred_check_branch
        %209 = sbr.rel (%p206) target = $region12
      $region11: #{tpu_custom_call.1} parent=5 // pred_region
        %s210 = ssub.s32 %s18, 1
        // Predicated region
        $region13: #{tpu_custom_call.1} parent=11 // pred_check
          %p211 = pneg %p65
        $region14: #{tpu_custom_call.1} parent=11 // pred_check_branch
          %213 = sbr.rel (%p211) target = $region16
        $region15: #{tpu_custom_call.1} parent=11 // pred_region
          %s215 = ssub.s32 1536, 1536
          %216 = vsyncadd [#allocation3], %s215
          %s217 = sshll.u32 [#allocation2], 4
          %s218 = int_to_ptr.vmem [resolvable:$true] %s217
          %223 = dma.hbm_to_vmem [thread:$0]  %s1, 1536, %s218, [#allocation3], 64, 64, 4
        $region16: #{tpu_custom_call.1} parent=11 // pred_fallthru
          _
        // Predicated region
        $region17: #{tpu_custom_call.1} parent=11 // pred_check
          %p224 = pneg %p86
        $region18: #{tpu_custom_call.1} parent=11 // pred_check_branch
          %226 = sbr.rel (%p224) target = $region20
        $region19: #{tpu_custom_call.1} parent=11 // pred_region
          _
        $region20: #{tpu_custom_call.1} parent=11 // pred_fallthru
          _
        // Predicated region
        $region21: #{tpu_custom_call.1} parent=11 // pred_check
          %p227 = pneg %p107
        $region22: #{tpu_custom_call.1} parent=11 // pred_check_branch
          %229 = sbr.rel (%p227) target = $region24
        $region23: #{tpu_custom_call.1} parent=11 // pred_region
          %s231 = ssub.s32 3072, 3072
          %232 = vsyncadd [#allocation6], %s231
          %s233 = sshll.u32 [#allocation5], 4
          %s234 = int_to_ptr.vmem [resolvable:$true] %s233
          %239 = dma.hbm_to_vmem [thread:$0]  %s3, 3072, %s234, [#allocation6], 64, 64, 4
        $region24: #{tpu_custom_call.1} parent=11 // pred_fallthru
          _
        // Predicated region
        $region25: #{tpu_custom_call.1} parent=11 // pred_check
          %p240 = pneg %p128
        $region26: #{tpu_custom_call.1} parent=11 // pred_check_branch
          %242 = sbr.rel (%p240) target = $region28
        $region27: #{tpu_custom_call.1} parent=11 // pred_region
          _
        $region28: #{tpu_custom_call.1} parent=11 // pred_fallthru
          _
        // Predicated region
        $region29: #{tpu_custom_call.1} parent=11 // pred_check
          %p243 = pneg %p149
        $region30: #{tpu_custom_call.1} parent=11 // pred_check_branch
          %245 = sbr.rel (%p243) target = $region32
        $region31: #{tpu_custom_call.1} parent=11 // pred_region
          _
        $region32: #{tpu_custom_call.1} parent=11 // pred_fallthru
          _
        // Predicated region
        $region33: #{tpu_custom_call.1} parent=11 // pred_check
          %p246 = pneg %p170
        $region34: #{tpu_custom_call.1} parent=11 // pred_check_branch
          %248 = sbr.rel (%p246) target = $region36
        $region35: #{tpu_custom_call.1} parent=11 // pred_region
          _
        $region36: #{tpu_custom_call.1} parent=11 // pred_fallthru
          _
      $region12: #{tpu_custom_call.1} parent=5 // pred_fallthru
        _
      %p249 = scmp.lt.s32.totalorder %s18, 2
      // Predicated region
      $region37: #{tpu_custom_call.1} parent=5 // pred_check
        %p250 = pneg %p249
      $region38: #{tpu_custom_call.1} parent=5 // pred_check_branch
        %252 = sbr.rel (%p250) target = $region40
      $region39: #{tpu_custom_call.1} parent=5 // pred_region
        // Predicated region
        $region41: #{tpu_custom_call.1} parent=39 // pred_check
          %p253 = pneg %p38
        $region42: #{tpu_custom_call.1} parent=39 // pred_check_branch
          %255 = sbr.rel (%p253) target = $region44
        $region43: #{tpu_custom_call.1} parent=39 // pred_region
          %p256 = scmp.lt.s32.totalorder %s18, 1
          %s257 = scalar_select %p256, %s18, 1
          %s258 = smul.addr %s257, 3
          %s259 = smul.addr %s258, 8
          %s260 = scalar_lea.vmem %s0, %s259
        $region44: #{tpu_custom_call.1} parent=39 // pred_fallthru
          _
      $region40: #{tpu_custom_call.1} parent=5 // pred_fallthru
        _
      %p261 = scmp.le.s32.totalorder 1, %s18
      %p262 = scmp.lt.s32.totalorder %s18, 3
      %p263 = pnand %p261, %p262
      %p264 = pneg %p263
      // Predicated region
      $region45: #{tpu_custom_call.1} parent=5 // pred_check
        _
      $region46: #{tpu_custom_call.1} parent=5 // pred_check_branch
        %266 = sbr.rel (%p263) target = $region48
      $region47: #{tpu_custom_call.1} parent=5 // pred_region
        %s267 = ssub.s32 %s18, 1
        // Predicated region
        $region49: #{tpu_custom_call.1} parent=47 // pred_check
          %p268 = pneg %p65
        $region50: #{tpu_custom_call.1} parent=47 // pred_check_branch
          %270 = sbr.rel (%p268) target = $region52
        $region51: #{tpu_custom_call.1} parent=47 // pred_region
          %271 = dma.done [#allocation3], 1536
        $region52: #{tpu_custom_call.1} parent=47 // pred_fallthru
          _
        // Predicated region
        $region53: #{tpu_custom_call.1} parent=47 // pred_check
          %p272 = pneg %p107
        $region54: #{tpu_custom_call.1} parent=47 // pred_check_branch
          %274 = sbr.rel (%p272) target = $region56
        $region55: #{tpu_custom_call.1} parent=47 // pred_region
          %275 = dma.done [#allocation6], 3072
        $region56: #{tpu_custom_call.1} parent=47 // pred_fallthru
          _
        %p276 = scmp.lt.s32.totalorder %s23, 1
        %s277 = scalar_select %p276, %s23, 1
        %s278 = smul.addr %s277, 3
        %s279 = smul.addr %s278, 8
        %s280 = scalar_lea.vmem %s0, %s279
        %p281 = pneg %p44
        %p282 = pneg %p41
        %p283 = pneg %p65
        %p284 = pneg %p62
        %p285 = pneg %p86
        %p286 = pneg %p83
        %p287 = pneg %p107
        %p288 = pneg %p104
        %p289 = pneg %p128
        %p290 = pneg %p125
        %p291 = pneg %p149
        %p292 = pneg %p146
        %p293 = pneg %p170
        %p294 = pneg %p167
        %p295 = pneg %p196
        %p296 = pneg %p193
        %s297 = sand.u32 %s183, 1
        %s298 = scalar_lea.sflag [#allocation4], %s297
        %s299 = sand.u32 %s183, 1
        %s300 = smul.addr %s299, 16
        %s301 = scalar_lea.vmem [#allocation7], %s300
        %p302 = scmp.lt.s32.totalorder %s23, 1
        %s303 = scalar_select %p302, %s23, 1
        %s304 = smul.addr %s303, 3
        %s305 = smul.addr %s304, 8
        %s306 = scalar_lea.vmem %s0, %s305
        %v308 = vld [vmem:[%s306] sm:$0xff]
        %v309 = vld [vmem:[%s306 + $0x8] sm:$0xff]
        %v310 = vpack.c.bf16 %v309, %v308
        %v311 = vld [vmem:[#allocation2] sm:$0xf]
        %v312 = vld [vmem:[#allocation2 + $0x4] sm:$0xf]
        %v313 = vld [vmem:[#allocation2 + $0x8] sm:$0xf]
        %v314 = vld [vmem:[#allocation2 + $0xc] sm:$0xf]
        %v315 = vld [vmem:[#allocation2 + $0x10] sm:$0xf]
        %v316 = vld [vmem:[#allocation2 + $0x14] sm:$0xf]
        %v317 = vld [vmem:[#allocation2 + $0x18] sm:$0xf]
        %v318 = vld [vmem:[#allocation2 + $0x1c] sm:$0xf]
        %v319 = vld [vmem:[%s5] sm:$0xf]
        %v320 = vld [vmem:[%s5 + $0x4] sm:$0xf]
        %v321 = vld [vmem:[%s5 + $0x8] sm:$0xf]
        %v322 = vld [vmem:[%s5 + $0xc] sm:$0xf]
        %v323 = vld [vmem:[%s5 + $0x10] sm:$0xf]
        %v324 = vld [vmem:[%s5 + $0x14] sm:$0xf]
        %v325 = vld [vmem:[%s5 + $0x18] sm:$0xf]
        %v326 = vld [vmem:[%s5 + $0x1c] sm:$0xf]
        %v327 = vld [vmem:[%s306 + $0x1] sm:$0xff]
        %v328 = vld [vmem:[%s306 + $0x9] sm:$0xff]
        %v329 = vpack.c.bf16 %v328, %v327
        %s330 = scalar_lea.vmem [#allocation2], 32
        %v331 = vld [vmem:[%s330] sm:$0xf]
        %v332 = vld [vmem:[%s330 + $0x4] sm:$0xf]
        %v333 = vld [vmem:[%s330 + $0x8] sm:$0xf]
        %v334 = vld [vmem:[%s330 + $0xc] sm:$0xf]
        %v335 = vld [vmem:[%s330 + $0x10] sm:$0xf]
        %v336 = vld [vmem:[%s330 + $0x14] sm:$0xf]
        %v337 = vld [vmem:[%s330 + $0x18] sm:$0xf]
        %v338 = vld [vmem:[%s330 + $0x1c] sm:$0xf]
        %v347 = vunpack.c.l.b16 %v331
        %v348 = vunpack.c.l.b16 %v332
        %v349 = vunpack.c.l.b16 %v333
        %v350 = vunpack.c.l.b16 %v334
        %v351 = vunpack.c.l.b16 %v335
        %v352 = vunpack.c.l.b16 %v336
        %v353 = vunpack.c.l.b16 %v337
        %v354 = vunpack.c.l.b16 %v338
        %v355 = vpack.c.b16 %v348, %v347
        %v356 = vpack.c.b16 %v350, %v349
        %v357 = vpack.c.b16 %v352, %v351
        %v358 = vpack.c.b16 %v354, %v353
        %vm363 = vcmask 523264
        %v365 = vsel %vm363, %v329, 0
        %367 = vmatprep.subr.bf16.mxu0 0
        %368 = vmatpush1.bf16.msra.mxu0 %v355
        %369 = vmatprep.subr.bf16.mxu0 0
        %370 = vmatpush1.bf16.msra.mxu0 %v356
        %371 = vmatprep.subr.bf16.mxu0 0
        %372 = vmatpush1.bf16.msra.mxu0 %v357
        %373 = vmatprep.subr.bf16.mxu0 0
        %374 = vmatpush1.bf16.msra.mxu0 %v358
        %375 = vmatprep.subr.bf16.mxu0 0
        %376 = vmatpush1.bf16.msra.mxu0 0
        %377 = vmatprep.subr.bf16.mxu0 0
        %378 = vmatpush1.bf16.msra.mxu0 0
        %379 = vmatprep.subr.bf16.mxu0 0
        %380 = vmatpush1.bf16.msra.mxu0 0
        %381 = vmatprep.subr.bf16.mxu0 0
        %382 = vmatpush1.bf16.msra.mxu0 0
        %383 = vmatprep.subr.bf16.mxu0 0
        %384 = vmatpush1.bf16.msra.mxu0 0
        %385 = vmatprep.subr.bf16.mxu0 0
        %386 = vmatpush1.bf16.msra.mxu0 0
        %387 = vmatprep.subr.bf16.mxu0 0
        %388 = vmatpush1.bf16.msra.mxu0 0
        %389 = vmatprep.subr.bf16.mxu0 0
        %390 = vmatpush1.bf16.msra.mxu0 0
        %391 = vmatprep.subr.bf16.mxu0 0
        %392 = vmatpush1.bf16.msra.mxu0 0
        %393 = vmatprep.subr.bf16.mxu0 0
        %394 = vmatpush1.bf16.msra.mxu0 0
        %395 = vmatprep.subr.bf16.mxu0 0
        %396 = vmatpush1.bf16.msra.mxu0 0
        %397 = vmatprep.subr.bf16.mxu0 0
        %398 = vmatpush1.bf16.msra.mxu0 0
        %399 = vmatprep.mubr.bf16.mxu0 0
        %400 = vmatmul.mubr.bf16.gmra.mrb[0].mxu0 %v365
        %v401 = vpop.f32.mrb[0].mxu0
        %v402 = vadd.f32 0.0, %v401
        %v403 = vpop.f32.mrb[0].mxu0
        %v404 = vpop.f32.mrb[0].mxu0
        %v405 = vadd.f32 0.0, %v404
        %v406 = vpop.f32.mrb[0].mxu0
        %407 = vdwg.mxu0
        %v416 = vunpack.c.l.b16 %v311
        %v417 = vunpack.c.l.b16 %v312
        %v418 = vunpack.c.l.b16 %v313
        %v419 = vunpack.c.l.b16 %v314
        %v420 = vunpack.c.l.b16 %v315
        %v421 = vunpack.c.l.b16 %v316
        %v422 = vunpack.c.l.b16 %v317
        %v423 = vunpack.c.l.b16 %v318
        %v424 = vpack.c.b16 %v417, %v416
        %v425 = vpack.c.b16 %v419, %v418
        %v426 = vpack.c.b16 %v421, %v420
        %v427 = vpack.c.b16 %v423, %v422
        %v433 = vsel %vm363, %v310, 0
        %435 = vmatprep.subr.bf16.mxu0 0
        %436 = vmatpush1.bf16.msra.mxu0 %v424
        %437 = vmatprep.subr.bf16.mxu0 0
        %438 = vmatpush1.bf16.msra.mxu0 %v425
        %439 = vmatprep.subr.bf16.mxu0 0
        %440 = vmatpush1.bf16.msra.mxu0 %v426
        %441 = vmatprep.subr.bf16.mxu0 0
        %442 = vmatpush1.bf16.msra.mxu0 %v427
        %443 = vmatprep.subr.bf16.mxu0 0
        %444 = vmatpush1.bf16.msra.mxu0 0
        %445 = vmatprep.subr.bf16.mxu0 0
        %446 = vmatpush1.bf16.msra.mxu0 0
        %447 = vmatprep.subr.bf16.mxu0 0
        %448 = vmatpush1.bf16.msra.mxu0 0
        %449 = vmatprep.subr.bf16.mxu0 0
        %450 = vmatpush1.bf16.msra.mxu0 0
        %451 = vmatprep.subr.bf16.mxu0 0
        %452 = vmatpush1.bf16.msra.mxu0 0
        %453 = vmatprep.subr.bf16.mxu0 0
        %454 = vmatpush1.bf16.msra.mxu0 0
        %455 = vmatprep.subr.bf16.mxu0 0
        %456 = vmatpush1.bf16.msra.mxu0 0
        %457 = vmatprep.subr.bf16.mxu0 0
        %458 = vmatpush1.bf16.msra.mxu0 0
        %459 = vmatprep.subr.bf16.mxu0 0
        %460 = vmatpush1.bf16.msra.mxu0 0
        %461 = vmatprep.subr.bf16.mxu0 0
        %462 = vmatpush1.bf16.msra.mxu0 0
        %463 = vmatprep.subr.bf16.mxu0 0
        %464 = vmatpush1.bf16.msra.mxu0 0
        %465 = vmatprep.subr.bf16.mxu0 0
        %466 = vmatpush1.bf16.msra.mxu0 0
        %467 = vmatprep.mubr.bf16.mxu0 0
        %468 = vmatmul.mubr.bf16.gmra.mrb[0].mxu0 %v433
        %v469 = vpop.f32.mrb[0].mxu0
        %v470 = vadd.f32 %v402, %v469
        %v471 = vpop.f32.mrb[0].mxu0
        %v472 = vpop.f32.mrb[0].mxu0
        %v473 = vadd.f32 %v405, %v472
        %v474 = vpop.f32.mrb[0].mxu0
        %475 = vdwg.mxu0
        %s476 = scalar_lea.vmem %s5, 32
        %v477 = vld [vmem:[%s476] sm:$0xf]
        %v478 = vld [vmem:[%s476 + $0x4] sm:$0xf]
        %v479 = vld [vmem:[%s476 + $0x8] sm:$0xf]
        %v480 = vld [vmem:[%s476 + $0xc] sm:$0xf]
        %v481 = vld [vmem:[%s476 + $0x10] sm:$0xf]
        %v482 = vld [vmem:[%s476 + $0x14] sm:$0xf]
        %v483 = vld [vmem:[%s476 + $0x18] sm:$0xf]
        %v484 = vld [vmem:[%s476 + $0x1c] sm:$0xf]
        %v493 = vunpack.c.l.b16 %v477
        %v494 = vunpack.c.l.b16 %v478
        %v495 = vunpack.c.l.b16 %v479
        %v496 = vunpack.c.l.b16 %v480
        %v497 = vunpack.c.l.b16 %v481
        %v498 = vunpack.c.l.b16 %v482
        %v499 = vunpack.c.l.b16 %v483
        %v500 = vunpack.c.l.b16 %v484
        %v501 = vpack.c.b16 %v494, %v493
        %v502 = vpack.c.b16 %v496, %v495
        %v503 = vpack.c.b16 %v498, %v497
        %v504 = vpack.c.b16 %v500, %v499
        %509 = vmatprep.subr.bf16.mxu0 0
        %510 = vmatpush1.bf16.msra.mxu0 %v501
        %511 = vmatprep.subr.bf16.mxu0 0
        %512 = vmatpush1.bf16.msra.mxu0 %v502
        %513 = vmatprep.subr.bf16.mxu0 0
        %514 = vmatpush1.bf16.msra.mxu0 %v503
        %515 = vmatprep.subr.bf16.mxu0 0
        %516 = vmatpush1.bf16.msra.mxu0 %v504
        %517 = vmatprep.subr.bf16.mxu0 0
        %518 = vmatpush1.bf16.msra.mxu0 0
        %519 = vmatprep.subr.bf16.mxu0 0
        %520 = vmatpush1.bf16.msra.mxu0 0
        %521 = vmatprep.subr.bf16.mxu0 0
        %522 = vmatpush1.bf16.msra.mxu0 0
        %523 = vmatprep.subr.bf16.mxu0 0
        %524 = vmatpush1.bf16.msra.mxu0 0
        %525 = vmatprep.subr.bf16.mxu0 0
        %526 = vmatpush1.bf16.msra.mxu0 0
        %527 = vmatprep.subr.bf16.mxu0 0
        %528 = vmatpush1.bf16.msra.mxu0 0
        %529 = vmatprep.subr.bf16.mxu0 0
        %530 = vmatpush1.bf16.msra.mxu0 0
        %531 = vmatprep.subr.bf16.mxu0 0
        %532 = vmatpush1.bf16.msra.mxu0 0
        %533 = vmatprep.subr.bf16.mxu0 0
        %534 = vmatpush1.bf16.msra.mxu0 0
        %535 = vmatprep.subr.bf16.mxu0 0
        %536 = vmatpush1.bf16.msra.mxu0 0
        %537 = vmatprep.subr.bf16.mxu0 0
        %538 = vmatpush1.bf16.msra.mxu0 0
        %539 = vmatprep.subr.bf16.mxu0 0
        %540 = vmatpush1.bf16.msra.mxu0 0
        %541 = vmatprep.mubr.bf16.mxu0 0
        %542 = vmatmul.mubr.bf16.gmra.mrb[0].mxu0 %v365
        %v543 = vpop.f32.mrb[0].mxu0
        %v544 = vadd.f32 0.0, %v543
        %v545 = vpop.f32.mrb[0].mxu0
        %v546 = vpop.f32.mrb[0].mxu0
        %v547 = vadd.f32 0.0, %v546
        %v548 = vpop.f32.mrb[0].mxu0
        %549 = vdwg.mxu0
        %v558 = vunpack.c.l.b16 %v319
        %v559 = vunpack.c.l.b16 %v320
        %v560 = vunpack.c.l.b16 %v321
        %v561 = vunpack.c.l.b16 %v322
        %v562 = vunpack.c.l.b16 %v323
        %v563 = vunpack.c.l.b16 %v324
        %v564 = vunpack.c.l.b16 %v325
        %v565 = vunpack.c.l.b16 %v326
        %v566 = vpack.c.b16 %v559, %v558
        %v567 = vpack.c.b16 %v561, %v560
        %v568 = vpack.c.b16 %v563, %v562
        %v569 = vpack.c.b16 %v565, %v564
        %574 = vmatprep.subr.bf16.mxu0 0
        %575 = vmatpush1.bf16.msra.mxu0 %v566
        %576 = vmatprep.subr.bf16.mxu0 0
        %577 = vmatpush1.bf16.msra.mxu0 %v567
        %578 = vmatprep.subr.bf16.mxu0 0
        %579 = vmatpush1.bf16.msra.mxu0 %v568
        %580 = vmatprep.subr.bf16.mxu0 0
        %581 = vmatpush1.bf16.msra.mxu0 %v569
        %582 = vmatprep.subr.bf16.mxu0 0
        %583 = vmatpush1.bf16.msra.mxu0 0
        %584 = vmatprep.subr.bf16.mxu0 0
        %585 = vmatpush1.bf16.msra.mxu0 0
        %586 = vmatprep.subr.bf16.mxu0 0
        %587 = vmatpush1.bf16.msra.mxu0 0
        %588 = vmatprep.subr.bf16.mxu0 0
        %589 = vmatpush1.bf16.msra.mxu0 0
        %590 = vmatprep.subr.bf16.mxu0 0
        %591 = vmatpush1.bf16.msra.mxu0 0
        %592 = vmatprep.subr.bf16.mxu0 0
        %593 = vmatpush1.bf16.msra.mxu0 0
        %594 = vmatprep.subr.bf16.mxu0 0
        %595 = vmatpush1.bf16.msra.mxu0 0
        %596 = vmatprep.subr.bf16.mxu0 0
        %597 = vmatpush1.bf16.msra.mxu0 0
        %598 = vmatprep.subr.bf16.mxu0 0
        %599 = vmatpush1.bf16.msra.mxu0 0
        %600 = vmatprep.subr.bf16.mxu0 0
        %601 = vmatpush1.bf16.msra.mxu0 0
        %602 = vmatprep.subr.bf16.mxu0 0
        %603 = vmatpush1.bf16.msra.mxu0 0
        %604 = vmatprep.subr.bf16.mxu0 0
        %605 = vmatpush1.bf16.msra.mxu0 0
        %606 = vmatprep.mubr.bf16.mxu0 0
        %607 = vmatmul.mubr.bf16.gmra.mrb[0].mxu0 %v433
        %v608 = vpop.f32.mrb[0].mxu0
        %v609 = vadd.f32 %v544, %v608
        %v610 = vpop.f32.mrb[0].mxu0
        %v611 = vpop.f32.mrb[0].mxu0
        %v612 = vadd.f32 %v547, %v611
        %v613 = vpop.f32.mrb[0].mxu0
        %614 = vdwg.mxu0
        %v615 = vld [vmem:[%s306 + $0x2] sm:$0xff]
        %v616 = vld [vmem:[%s306 + $0xa] sm:$0xff]
        %v617 = vpack.c.bf16 %v616, %v615
        %s618 = scalar_lea.vmem [#allocation2], 64
        %v619 = vld [vmem:[%s618] sm:$0xf]
        %v620 = vld [vmem:[%s618 + $0x4] sm:$0xf]
        %v621 = vld [vmem:[%s618 + $0x8] sm:$0xf]
        %v622 = vld [vmem:[%s618 + $0xc] sm:$0xf]
        %v623 = vld [vmem:[%s618 + $0x10] sm:$0xf]
        %v624 = vld [vmem:[%s618 + $0x14] sm:$0xf]
        %v625 = vld [vmem:[%s618 + $0x18] sm:$0xf]
        %v626 = vld [vmem:[%s618 + $0x1c] sm:$0xf]
        %v635 = vunpack.c.l.b16 %v619
        %v636 = vunpack.c.l.b16 %v620
        %v637 = vunpack.c.l.b16 %v621
        %v638 = vunpack.c.l.b16 %v622
        %v639 = vunpack.c.l.b16 %v623
        %v640 = vunpack.c.l.b16 %v624
        %v641 = vunpack.c.l.b16 %v625
        %v642 = vunpack.c.l.b16 %v626
        %v643 = vpack.c.b16 %v636, %v635
        %v644 = vpack.c.b16 %v638, %v637
        %v645 = vpack.c.b16 %v640, %v639
        %v646 = vpack.c.b16 %v642, %v641
        %v652 = vsel %vm363, %v617, 0
        %654 = vmatprep.subr.bf16.mxu0 0
        %655 = vmatpush1.bf16.msra.mxu0 %v643
        %656 = vmatprep.subr.bf16.mxu0 0
        %657 = vmatpush1.bf16.msra.mxu0 %v644
        %658 = vmatprep.subr.bf16.mxu0 0
        %659 = vmatpush1.bf16.msra.mxu0 %v645
        %660 = vmatprep.subr.bf16.mxu0 0
        %661 = vmatpush1.bf16.msra.mxu0 %v646
        %662 = vmatprep.subr.bf16.mxu0 0
        %663 = vmatpush1.bf16.msra.mxu0 0
        %664 = vmatprep.subr.bf16.mxu0 0
        %665 = vmatpush1.bf16.msra.mxu0 0
        %666 = vmatprep.subr.bf16.mxu0 0
        %667 = vmatpush1.bf16.msra.mxu0 0
        %668 = vmatprep.subr.bf16.mxu0 0
        %669 = vmatpush1.bf16.msra.mxu0 0
        %670 = vmatprep.subr.bf16.mxu0 0
        %671 = vmatpush1.bf16.msra.mxu0 0
        %672 = vmatprep.subr.bf16.mxu0 0
        %673 = vmatpush1.bf16.msra.mxu0 0
        %674 = vmatprep.subr.bf16.mxu0 0
        %675 = vmatpush1.bf16.msra.mxu0 0
        %676 = vmatprep.subr.bf16.mxu0 0
        %677 = vmatpush1.bf16.msra.mxu0 0
        %678 = vmatprep.subr.bf16.mxu0 0
        %679 = vmatpush1.bf16.msra.mxu0 0
        %680 = vmatprep.subr.bf16.mxu0 0
        %681 = vmatpush1.bf16.msra.mxu0 0
        %682 = vmatprep.subr.bf16.mxu0 0
        %683 = vmatpush1.bf16.msra.mxu0 0
        %684 = vmatprep.subr.bf16.mxu0 0
        %685 = vmatpush1.bf16.msra.mxu0 0
        %686 = vmatprep.mubr.bf16.mxu0 0
        %687 = vmatmul.mubr.bf16.gmra.mrb[0].mxu0 %v652
        %v688 = vpop.f32.mrb[0].mxu0
        %v689 = vadd.f32 0.0, %v688
        %v690 = vpop.f32.mrb[0].mxu0
        %v691 = vpop.f32.mrb[0].mxu0
        %v692 = vadd.f32 0.0, %v691
        %v693 = vpop.f32.mrb[0].mxu0
        %694 = vdwg.mxu0
        %v695 = vadd.f32 %v470, %v689
        %v696 = vadd.f32 %v473, %v692
        %s697 = scalar_lea.vmem %s5, 64
        %v698 = vld [vmem:[%s697] sm:$0xf]
        %v699 = vld [vmem:[%s697 + $0x4] sm:$0xf]
        %v700 = vld [vmem:[%s697 + $0x8] sm:$0xf]
        %v701 = vld [vmem:[%s697 + $0xc] sm:$0xf]
        %v702 = vld [vmem:[%s697 + $0x10] sm:$0xf]
        %v703 = vld [vmem:[%s697 + $0x14] sm:$0xf]
        %v704 = vld [vmem:[%s697 + $0x18] sm:$0xf]
        %v705 = vld [vmem:[%s697 + $0x1c] sm:$0xf]
        %v714 = vunpack.c.l.b16 %v698
        %v715 = vunpack.c.l.b16 %v699
        %v716 = vunpack.c.l.b16 %v700
        %v717 = vunpack.c.l.b16 %v701
        %v718 = vunpack.c.l.b16 %v702
        %v719 = vunpack.c.l.b16 %v703
        %v720 = vunpack.c.l.b16 %v704
        %v721 = vunpack.c.l.b16 %v705
        %v722 = vpack.c.b16 %v715, %v714
        %v723 = vpack.c.b16 %v717, %v716
        %v724 = vpack.c.b16 %v719, %v718
        %v725 = vpack.c.b16 %v721, %v720
        %730 = vmatprep.subr.bf16.mxu0 0
        %731 = vmatpush1.bf16.msra.mxu0 %v722
        %732 = vmatprep.subr.bf16.mxu0 0
        %733 = vmatpush1.bf16.msra.mxu0 %v723
        %734 = vmatprep.subr.bf16.mxu0 0
        %735 = vmatpush1.bf16.msra.mxu0 %v724
        %736 = vmatprep.subr.bf16.mxu0 0
        %737 = vmatpush1.bf16.msra.mxu0 %v725
        %738 = vmatprep.subr.bf16.mxu0 0
        %739 = vmatpush1.bf16.msra.mxu0 0
        %740 = vmatprep.subr.bf16.mxu0 0
        %741 = vmatpush1.bf16.msra.mxu0 0
        %742 = vmatprep.subr.bf16.mxu0 0
        %743 = vmatpush1.bf16.msra.mxu0 0
        %744 = vmatprep.subr.bf16.mxu0 0
        %745 = vmatpush1.bf16.msra.mxu0 0
        %746 = vmatprep.subr.bf16.mxu0 0
        %747 = vmatpush1.bf16.msra.mxu0 0
        %748 = vmatprep.subr.bf16.mxu0 0
        %749 = vmatpush1.bf16.msra.mxu0 0
        %750 = vmatprep.subr.bf16.mxu0 0
        %751 = vmatpush1.bf16.msra.mxu0 0
        %752 = vmatprep.subr.bf16.mxu0 0
        %753 = vmatpush1.bf16.msra.mxu0 0
        %754 = vmatprep.subr.bf16.mxu0 0
        %755 = vmatpush1.bf16.msra.mxu0 0
        %756 = vmatprep.subr.bf16.mxu0 0
        %757 = vmatpush1.bf16.msra.mxu0 0
        %758 = vmatprep.subr.bf16.mxu0 0
        %759 = vmatpush1.bf16.msra.mxu0 0
        %760 = vmatprep.subr.bf16.mxu0 0
        %761 = vmatpush1.bf16.msra.mxu0 0
        %762 = vmatprep.mubr.bf16.mxu0 0
        %763 = vmatmul.mubr.bf16.gmra.mrb[0].mxu0 %v652
        %v764 = vpop.f32.mrb[0].mxu0
        %v765 = vadd.f32 0.0, %v764
        %v766 = vpop.f32.mrb[0].mxu0
        %v767 = vpop.f32.mrb[0].mxu0
        %v768 = vadd.f32 0.0, %v767
        %v769 = vpop.f32.mrb[0].mxu0
        %770 = vdwg.mxu0
        %v771 = vadd.f32 %v609, %v765
        %v772 = vadd.f32 %v612, %v768
        %v773 = vld [vmem:[%s2] sm:$0x1]
        %v775 = vlaneseq
        %v776 = vshrl.u32 %v775, 7
        %v777 = vsub.s32 0, %v776
        %v778 = vrot.slane %v773, %v777
        %v780 = vadd.f32 %v695, %v778
        %v781 = vadd.f32 %v696, %v778
        %v782 = vmax.f32 %v780, 0.0
        %v783 = vmax.f32 %v781, 0.0
        %v784 = vld [vmem:[%s6] sm:$0x1]
        %v786 = vlaneseq
        %v787 = vshrl.u32 %v786, 7
        %v788 = vsub.s32 0, %v787
        %v789 = vrot.slane %v784, %v788
        %v791 = vadd.f32 %v771, %v789
        %v792 = vadd.f32 %v772, %v789
        %v793 = vrot.slane %v782, 7
        %v794 = vrot.slane %v783, 7
        %v795 = vlaneseq
        %v796 = vshrl.u32 %v795, 7
        %vm797 = vcmp.lt.s32.totalorder %v796, 1
        %v798 = vsel %vm797, %v793, %v794
        %v799 = vsel %vm797, %v794, %v793
        %v800 = vadd.s32 %v796, 8
        %vm801 = vcmp.eq.s32.totalorder %v796, 0
        %vm802 = vcmp.eq.s32.totalorder %v800, 0
        %v803 = vsel %vm801, 0.0, %v799
        %v804 = vsel %vm802, 0.0, %v798
        %v805 = vpack.c.bf16 %v804, %v803
        %v806 = vld [vmem:[#allocation5] sm:$0xf]
        %v807 = vld [vmem:[#allocation5 + $0x4] sm:$0xf]
        %v808 = vld [vmem:[#allocation5 + $0x8] sm:$0xf]
        %v809 = vld [vmem:[#allocation5 + $0xc] sm:$0xf]
        %v810 = vld [vmem:[#allocation5 + $0x10] sm:$0xf]
        %v811 = vld [vmem:[#allocation5 + $0x14] sm:$0xf]
        %v812 = vld [vmem:[#allocation5 + $0x18] sm:$0xf]
        %v813 = vld [vmem:[#allocation5 + $0x1c] sm:$0xf]
        %v814 = vld [vmem:[#allocation5 + $0x20] sm:$0xf]
        %v815 = vld [vmem:[#allocation5 + $0x24] sm:$0xf]
        %v816 = vld [vmem:[#allocation5 + $0x28] sm:$0xf]
        %v817 = vld [vmem:[#allocation5 + $0x2c] sm:$0xf]
        %v818 = vld [vmem:[#allocation5 + $0x30] sm:$0xf]
        %v819 = vld [vmem:[#allocation5 + $0x34] sm:$0xf]
        %v820 = vld [vmem:[#allocation5 + $0x38] sm:$0xf]
        %v821 = vld [vmem:[#allocation5 + $0x3c] sm:$0xf]
        %v822 = vpack.c.bf16 %v783, %v782
        %s823 = scalar_lea.vmem [#allocation5], 64
        %v824 = vld [vmem:[%s823] sm:$0xf]
        %v825 = vld [vmem:[%s823 + $0x4] sm:$0xf]
        %v826 = vld [vmem:[%s823 + $0x8] sm:$0xf]
        %v827 = vld [vmem:[%s823 + $0xc] sm:$0xf]
        %v828 = vld [vmem:[%s823 + $0x10] sm:$0xf]
        %v829 = vld [vmem:[%s823 + $0x14] sm:$0xf]
        %v830 = vld [vmem:[%s823 + $0x18] sm:$0xf]
        %v831 = vld [vmem:[%s823 + $0x1c] sm:$0xf]
        %v832 = vld [vmem:[%s823 + $0x20] sm:$0xf]
        %v833 = vld [vmem:[%s823 + $0x24] sm:$0xf]
        %v834 = vld [vmem:[%s823 + $0x28] sm:$0xf]
        %v835 = vld [vmem:[%s823 + $0x2c] sm:$0xf]
        %v836 = vld [vmem:[%s823 + $0x30] sm:$0xf]
        %v837 = vld [vmem:[%s823 + $0x34] sm:$0xf]
        %v838 = vld [vmem:[%s823 + $0x38] sm:$0xf]
        %v839 = vld [vmem:[%s823 + $0x3c] sm:$0xf]
        %v856 = vunpack.c.l.b16 %v824
        %v857 = vunpack.c.l.b16 %v825
        %v858 = vunpack.c.l.b16 %v826
        %v859 = vunpack.c.l.b16 %v827
        %v860 = vunpack.c.l.b16 %v828
        %v861 = vunpack.c.l.b16 %v829
        %v862 = vunpack.c.l.b16 %v830
        %v863 = vunpack.c.l.b16 %v831
        %v864 = vunpack.c.l.b16 %v832
        %v865 = vunpack.c.l.b16 %v833
        %v866 = vunpack.c.l.b16 %v834
        %v867 = vunpack.c.l.b16 %v835
        %v868 = vunpack.c.l.b16 %v836
        %v869 = vunpack.c.l.b16 %v837
        %v870 = vunpack.c.l.b16 %v838
        %v871 = vunpack.c.l.b16 %v839
        %v872 = vpack.c.b16 %v857, %v856
        %v873 = vpack.c.b16 %v859, %v858
        %v874 = vpack.c.b16 %v861, %v860
        %v875 = vpack.c.b16 %v863, %v862
        %v876 = vpack.c.b16 %v865, %v864
        %v877 = vpack.c.b16 %v867, %v866
        %v878 = vpack.c.b16 %v869, %v868
        %v879 = vpack.c.b16 %v871, %v870
        %888 = vmatprep.subr.bf16.mxu0 0
        %889 = vmatpush1.bf16.msra.mxu0 %v872
        %890 = vmatprep.subr.bf16.mxu0 0
        %891 = vmatpush1.bf16.msra.mxu0 %v873
        %892 = vmatprep.subr.bf16.mxu0 0
        %893 = vmatpush1.bf16.msra.mxu0 %v874
        %894 = vmatprep.subr.bf16.mxu0 0
        %895 = vmatpush1.bf16.msra.mxu0 %v875
        %896 = vmatprep.subr.bf16.mxu0 0
        %897 = vmatpush1.bf16.msra.mxu0 %v876
        %898 = vmatprep.subr.bf16.mxu0 0
        %899 = vmatpush1.bf16.msra.mxu0 %v877
        %900 = vmatprep.subr.bf16.mxu0 0
        %901 = vmatpush1.bf16.msra.mxu0 %v878
        %902 = vmatprep.subr.bf16.mxu0 0
        %903 = vmatpush1.bf16.msra.mxu0 %v879
        %904 = vmatprep.subr.bf16.mxu0 0
        %905 = vmatpush1.bf16.msra.mxu0 0
        %906 = vmatprep.subr.bf16.mxu0 0
        %907 = vmatpush1.bf16.msra.mxu0 0
        %908 = vmatprep.subr.bf16.mxu0 0
        %909 = vmatpush1.bf16.msra.mxu0 0
        %910 = vmatprep.subr.bf16.mxu0 0
        %911 = vmatpush1.bf16.msra.mxu0 0
        %912 = vmatprep.subr.bf16.mxu0 0
        %913 = vmatpush1.bf16.msra.mxu0 0
        %914 = vmatprep.subr.bf16.mxu0 0
        %915 = vmatpush1.bf16.msra.mxu0 0
        %916 = vmatprep.subr.bf16.mxu0 0
        %917 = vmatpush1.bf16.msra.mxu0 0
        %918 = vmatprep.subr.bf16.mxu0 0
        %919 = vmatpush1.bf16.msra.mxu0 0
        %920 = vmatprep.mubr.bf16.mxu0 0
        %921 = vmatmul.mubr.bf16.gmra.mrb[0].mxu0 %v822
        %v922 = vpop.f32.mrb[0].mxu0
        %v923 = vadd.f32 0.0, %v922
        %v924 = vpop.f32.mrb[0].mxu0
        %v925 = vpop.f32.mrb[0].mxu0
        %v926 = vadd.f32 0.0, %v925
        %v927 = vpop.f32.mrb[0].mxu0
        %928 = vdwg.mxu0
        %v945 = vunpack.c.l.b16 %v806
        %v946 = vunpack.c.l.b16 %v807
        %v947 = vunpack.c.l.b16 %v808
        %v948 = vunpack.c.l.b16 %v809
        %v949 = vunpack.c.l.b16 %v810
        %v950 = vunpack.c.l.b16 %v811
        %v951 = vunpack.c.l.b16 %v812
        %v952 = vunpack.c.l.b16 %v813
        %v953 = vunpack.c.l.b16 %v814
        %v954 = vunpack.c.l.b16 %v815
        %v955 = vunpack.c.l.b16 %v816
        %v956 = vunpack.c.l.b16 %v817
        %v957 = vunpack.c.l.b16 %v818
        %v958 = vunpack.c.l.b16 %v819
        %v959 = vunpack.c.l.b16 %v820
        %v960 = vunpack.c.l.b16 %v821
        %v961 = vpack.c.b16 %v946, %v945
        %v962 = vpack.c.b16 %v948, %v947
        %v963 = vpack.c.b16 %v950, %v949
        %v964 = vpack.c.b16 %v952, %v951
        %v965 = vpack.c.b16 %v954, %v953
        %v966 = vpack.c.b16 %v956, %v955
        %v967 = vpack.c.b16 %v958, %v957
        %v968 = vpack.c.b16 %v960, %v959
        %977 = vmatprep.subr.bf16.mxu0 0
        %978 = vmatpush1.bf16.msra.mxu0 %v961
        %979 = vmatprep.subr.bf16.mxu0 0
        %980 = vmatpush1.bf16.msra.mxu0 %v962
        %981 = vmatprep.subr.bf16.mxu0 0
        %982 = vmatpush1.bf16.msra.mxu0 %v963
        %983 = vmatprep.subr.bf16.mxu0 0
        %984 = vmatpush1.bf16.msra.mxu0 %v964
        %985 = vmatprep.subr.bf16.mxu0 0
        %986 = vmatpush1.bf16.msra.mxu0 %v965
        %987 = vmatprep.subr.bf16.mxu0 0
        %988 = vmatpush1.bf16.msra.mxu0 %v966
        %989 = vmatprep.subr.bf16.mxu0 0
        %990 = vmatpush1.bf16.msra.mxu0 %v967
        %991 = vmatprep.subr.bf16.mxu0 0
        %992 = vmatpush1.bf16.msra.mxu0 %v968
        %993 = vmatprep.subr.bf16.mxu0 0
        %994 = vmatpush1.bf16.msra.mxu0 0
        %995 = vmatprep.subr.bf16.mxu0 0
        %996 = vmatpush1.bf16.msra.mxu0 0
        %997 = vmatprep.subr.bf16.mxu0 0
        %998 = vmatpush1.bf16.msra.mxu0 0
        %999 = vmatprep.subr.bf16.mxu0 0
        %1000 = vmatpush1.bf16.msra.mxu0 0
        %1001 = vmatprep.subr.bf16.mxu0 0
        %1002 = vmatpush1.bf16.msra.mxu0 0
        %1003 = vmatprep.subr.bf16.mxu0 0
        %1004 = vmatpush1.bf16.msra.mxu0 0
        %1005 = vmatprep.subr.bf16.mxu0 0
        %1006 = vmatpush1.bf16.msra.mxu0 0
        %1007 = vmatprep.subr.bf16.mxu0 0
        %1008 = vmatpush1.bf16.msra.mxu0 0
        %1009 = vmatprep.mubr.bf16.mxu0 0
        %1010 = vmatmul.mubr.bf16.gmra.mrb[0].mxu0 %v805
        %v1011 = vpop.f32.mrb[0].mxu0
        %v1012 = vadd.f32 %v923, %v1011
        %v1013 = vpop.f32.mrb[0].mxu0
        %v1014 = vpop.f32.mrb[0].mxu0
        %v1015 = vadd.f32 %v926, %v1014
        %v1016 = vpop.f32.mrb[0].mxu0
        %1017 = vdwg.mxu0
        %v1018 = vrot.slane %v782, 1
        %v1019 = vrot.slane %v783, 1
        %vm1020 = vcmp.lt.s32.totalorder %v796, 7
        %v1021 = vsel %vm1020, %v1018, %v1019
        %v1022 = vsel %vm1020, %v1019, %v1018
        %vm1023 = vcmp.eq.s32.totalorder %v796, 15
        %vm1024 = vcmp.eq.s32.totalorder %v800, 15
        %v1025 = vsel %vm1023, 0.0, %v1021
        %v1026 = vsel %vm1024, 0.0, %v1022
        %v1027 = vpack.c.bf16 %v1026, %v1025
        %s1028 = scalar_lea.vmem [#allocation5], 128
        %v1029 = vld [vmem:[%s1028] sm:$0xf]
        %v1030 = vld [vmem:[%s1028 + $0x4] sm:$0xf]
        %v1031 = vld [vmem:[%s1028 + $0x8] sm:$0xf]
        %v1032 = vld [vmem:[%s1028 + $0xc] sm:$0xf]
        %v1033 = vld [vmem:[%s1028 + $0x10] sm:$0xf]
        %v1034 = vld [vmem:[%s1028 + $0x14] sm:$0xf]
        %v1035 = vld [vmem:[%s1028 + $0x18] sm:$0xf]
        %v1036 = vld [vmem:[%s1028 + $0x1c] sm:$0xf]
        %v1037 = vld [vmem:[%s1028 + $0x20] sm:$0xf]
        %v1038 = vld [vmem:[%s1028 + $0x24] sm:$0xf]
        %v1039 = vld [vmem:[%s1028 + $0x28] sm:$0xf]
        %v1040 = vld [vmem:[%s1028 + $0x2c] sm:$0xf]
        %v1041 = vld [vmem:[%s1028 + $0x30] sm:$0xf]
        %v1042 = vld [vmem:[%s1028 + $0x34] sm:$0xf]
        %v1043 = vld [vmem:[%s1028 + $0x38] sm:$0xf]
        %v1044 = vld [vmem:[%s1028 + $0x3c] sm:$0xf]
        %v1061 = vunpack.c.l.b16 %v1029
        %v1062 = vunpack.c.l.b16 %v1030
        %v1063 = vunpack.c.l.b16 %v1031
        %v1064 = vunpack.c.l.b16 %v1032
        %v1065 = vunpack.c.l.b16 %v1033
        %v1066 = vunpack.c.l.b16 %v1034
        %v1067 = vunpack.c.l.b16 %v1035
        %v1068 = vunpack.c.l.b16 %v1036
        %v1069 = vunpack.c.l.b16 %v1037
        %v1070 = vunpack.c.l.b16 %v1038
        %v1071 = vunpack.c.l.b16 %v1039
        %v1072 = vunpack.c.l.b16 %v1040
        %v1073 = vunpack.c.l.b16 %v1041
        %v1074 = vunpack.c.l.b16 %v1042
        %v1075 = vunpack.c.l.b16 %v1043
        %v1076 = vunpack.c.l.b16 %v1044
        %v1077 = vpack.c.b16 %v1062, %v1061
        %v1078 = vpack.c.b16 %v1064, %v1063
        %v1079 = vpack.c.b16 %v1066, %v1065
        %v1080 = vpack.c.b16 %v1068, %v1067
        %v1081 = vpack.c.b16 %v1070, %v1069
        %v1082 = vpack.c.b16 %v1072, %v1071
        %v1083 = vpack.c.b16 %v1074, %v1073
        %v1084 = vpack.c.b16 %v1076, %v1075
        %1093 = vmatprep.subr.bf16.mxu0 0
        %1094 = vmatpush1.bf16.msra.mxu0 %v1077
        %1095 = vmatprep.subr.bf16.mxu0 0
        %1096 = vmatpush1.bf16.msra.mxu0 %v1078
        %1097 = vmatprep.subr.bf16.mxu0 0
        %1098 = vmatpush1.bf16.msra.mxu0 %v1079
        %1099 = vmatprep.subr.bf16.mxu0 0
        %1100 = vmatpush1.bf16.msra.mxu0 %v1080
        %1101 = vmatprep.subr.bf16.mxu0 0
        %1102 = vmatpush1.bf16.msra.mxu0 %v1081
        %1103 = vmatprep.subr.bf16.mxu0 0
        %1104 = vmatpush1.bf16.msra.mxu0 %v1082
        %1105 = vmatprep.subr.bf16.mxu0 0
        %1106 = vmatpush1.bf16.msra.mxu0 %v1083
        %1107 = vmatprep.subr.bf16.mxu0 0
        %1108 = vmatpush1.bf16.msra.mxu0 %v1084
        %1109 = vmatprep.subr.bf16.mxu0 0
        %1110 = vmatpush1.bf16.msra.mxu0 0
        %1111 = vmatprep.subr.bf16.mxu0 0
        %1112 = vmatpush1.bf16.msra.mxu0 0
        %1113 = vmatprep.subr.bf16.mxu0 0
        %1114 = vmatpush1.bf16.msra.mxu0 0
        %1115 = vmatprep.subr.bf16.mxu0 0
        %1116 = vmatpush1.bf16.msra.mxu0 0
        %1117 = vmatprep.subr.bf16.mxu0 0
        %1118 = vmatpush1.bf16.msra.mxu0 0
        %1119 = vmatprep.subr.bf16.mxu0 0
        %1120 = vmatpush1.bf16.msra.mxu0 0
        %1121 = vmatprep.subr.bf16.mxu0 0
        %1122 = vmatpush1.bf16.msra.mxu0 0
        %1123 = vmatprep.subr.bf16.mxu0 0
        %1124 = vmatpush1.bf16.msra.mxu0 0
        %1125 = vmatprep.mubr.bf16.mxu0 0
        %1126 = vmatmul.mubr.bf16.gmra.mrb[0].mxu0 %v1027
        %v1127 = vpop.f32.mrb[0].mxu0
        %v1128 = vadd.f32 0.0, %v1127
        %v1129 = vpop.f32.mrb[0].mxu0
        %v1130 = vpop.f32.mrb[0].mxu0
        %v1131 = vadd.f32 0.0, %v1130
        %v1132 = vpop.f32.mrb[0].mxu0
        %1133 = vdwg.mxu0
        %v1134 = vadd.f32 %v1012, %v1128
        %v1135 = vadd.f32 %v1015, %v1131
        %v1136 = vld [vmem:[%s4] sm:$0x1]
        %v1138 = vlaneseq
        %v1139 = vshrl.u32 %v1138, 7
        %v1140 = vsub.s32 0, %v1139
        %v1141 = vrot.slane %v1136, %v1140
        %v1143 = vadd.f32 %v1134, %v1141
        %v1144 = vadd.f32 %v1135, %v1141
        %v1145 = vadd.f32 %v1143, %v791
        %v1146 = vadd.f32 %v1144, %v792
        %v1147 = vmax.f32 %v1145, 0.0
        %v1148 = vmax.f32 %v1146, 0.0
        %1149 = vst [vmem:[%s301] sm:$0xff] %v1147
        %1150 = vst [vmem:[%s301 + $0x8] sm:$0xff] %v1148
        %s1151 = sand.u32 %s183, 1
        %s1152 = scalar_lea.sflag [#allocation4], %s1151
        %s1153 = sand.u32 %s183, 1
        %s1154 = smul.addr %s1153, 16
        %s1155 = scalar_lea.vmem [#allocation7], %s1154
        // Predicated region
        $region57: #{tpu_custom_call.1} parent=47 // pred_check
          %p1156 = pneg %p193
        $region58: #{tpu_custom_call.1} parent=47 // pred_check_branch
          %1158 = sbr.rel (%p1156) target = $region60
        $region59: #{tpu_custom_call.1} parent=47 // pred_region
          %s1160 = ssub.s32 256, 256
          %1161 = vsyncadd %s1152, %s1160
          %s1162 = smul.addr %s23, 2
          %s1163 = smul.addr %s1162, 128
          %s1164 = scalar_lea.hbm %s7, %s1163
          %s1165 = sshll.u32 %s1155, 4
          %s1166 = int_to_ptr.vmem [resolvable:$true] %s1165
          %1171 = dma.vmem_to_hbm [thread:$0]  %s1166, 256, %s1164, %s1152, 128, 128, 8
        $region60: #{tpu_custom_call.1} parent=47 // pred_fallthru
          _
      $region48: #{tpu_custom_call.1} parent=5 // pred_fallthru
        _
      %p1172 = scmp.le.s32.totalorder 2, %s18
      // Predicated region
      $region61: #{tpu_custom_call.1} parent=5 // pred_check
        %p1173 = pneg %p1172
      $region62: #{tpu_custom_call.1} parent=5 // pred_check_branch
        %1175 = sbr.rel (%p1173) target = $region64
      $region63: #{tpu_custom_call.1} parent=5 // pred_region
        %s1176 = ssub.s32 %s18, 2
        // Predicated region
        $region65: #{tpu_custom_call.1} parent=63 // pred_check
          %p1177 = pneg %p199
        $region66: #{tpu_custom_call.1} parent=63 // pred_check_branch
          %1179 = sbr.rel (%p1177) target = $region68
        $region67: #{tpu_custom_call.1} parent=63 // pred_region
          %s1180 = sand.u32 %s184, 1
          %s1181 = scalar_lea.sflag [#allocation4], %s1180
          %s1182 = sand.u32 %s184, 1
          %s1183 = smul.addr %s1182, 16
          %s1184 = scalar_lea.vmem [#allocation7], %s1183
          %1185 = dma.done %s1181, 256
        $region68: #{tpu_custom_call.1} parent=63 // pred_fallthru
          _
      $region64: #{tpu_custom_call.1} parent=5 // pred_fallthru
        _
    $region6: #{tpu_custom_call.1} parent=1 // loop_footer
      %s22 = sadd.s32 1, %s18
    $region7: #{tpu_custom_call.1} parent=1 // loop_footer_branch
      %17 = sbr.rel target = $region3
    $region8: #{tpu_custom_call.1} parent=1 // loop_exit
      _
    %1186 = vsyncpa [#allocation3], 1
    %s1187 = scalar_lea.sflag [#allocation3], 1
    %1188 = vsyncpa %s1187, 1
    %1189 = vsyncpa [#allocation6], 1
    %1190 = vsyncpa [#allocation4], 1
    %s1191 = scalar_lea.sflag [#allocation4], 1
    %1192 = vsyncpa %s1191, 1

</llo_original>
